<compile_context>
chip_gen: v5e
topology: v5e:2x2
jax: 0.10.0
libtpu: 0.0.40
codegen_flags: <defaults>
</compile_context>

<pallas_src>
import math
import functools

import jax
import jax.numpy as jnp
from jax.experimental import pallas as pl


def get_a_at(m, N):
    """JAX port of getAAt: m is (K, 1) real; returns A (K, N), At (N, K) complex64."""
    n = jnp.arange(N, dtype=jnp.float32)
    scale = 1.0 / math.sqrt(N)
    phase = -2.0 * math.pi * (m - 0.5) * (n - N / 2.0)          # (K, N) real
    A = (scale * (jnp.cos(phase) + 1j * jnp.sin(phase))).astype(jnp.complex64)
    At = jnp.conj(A.T)
    return A, At


def _real_block(z):
    """Real 2x2-block embedding [[Re, -Im], [Im, Re]] of a complex matrix."""
    zr = jnp.real(z).astype(jnp.float32)
    zi = jnp.imag(z).astype(jnp.float32)
    top = jnp.concatenate([zr, -zi], axis=1)
    bot = jnp.concatenate([zi, zr], axis=1)
    return jnp.concatenate([top, bot], axis=0)


# ----------------------------------------------------------------------------
# Single-invocation kernel.  Lanes are packed as (batch, coil, column); real
# and imaginary planes are stacked along sublanes ([Re; Im]) on the inputs and
# concatenated along lanes ([Re | Im]) on intermediate/right-hand operands.
#
#   atb[b] = sum_c conj(csm[b,c]) * ( atah @ (x*csm[b,c]) @ aatv
#                                     + sigma * Aht @ noise[b,c] @ Avt )
# ----------------------------------------------------------------------------
def _atb_kernel(x2_ref,     # (2M, N)           x as [Re; Im]
                rep_ref,    # (N, CN)            0/1 replication operator
                c2_ref,     # (2M, CN)            csm packed, [Re; Im]
                n2_ref,     # (2K, CK)            noise packed, [Re; Im]
                g2_ref,     # (2M, 2M)             real-embedded atah
                a2_ref,     # (2M, 2K)             real-embedded Aht
                r_ref,      # (2CN+2CK, 2CN)       block-diag right operator (sigma folded in)
                s_ref,      # (2CN, 2BN)            0/1 coil-summation operator
                o_ref,      # (M, 2BN)              output [Re | Im], lane-dense
                *, M, CN):
    f32 = jnp.float32

    # Replicate x across the B*ncoil lane blocks with one tiny matmul
    # (MXU has slack; avoids a redundant HBM DMA and sub-vreg lane concats).
    x2t = jnp.dot(x2_ref[...], rep_ref[...], preferred_element_type=f32)   # (2M, CN)
    xr, xi = x2t[:M], x2t[M:]

    c2 = c2_ref[...]
    cr, ci = c2[:M], c2[M:]

    # u = x * csm (complex, all batches/coils at once), stacked [Re; Im].
    ur = xr * cr - xi * ci
    ui = xr * ci + xi * cr
    u2 = jnp.concatenate([ur, ui], axis=0)                                  # (2M, CN)

    # Left multiplications with real-embedded operators: one MXU pass each.
    #   T = atah @ u          W = Aht @ noise
    t2 = jnp.dot(g2_ref[...], u2, preferred_element_type=f32)               # (2M, CN)
    w2 = jnp.dot(a2_ref[...], n2_ref[...], preferred_element_type=f32)      # (2M, CK)

    # Right multiplication for every (batch, coil) block in ONE real matmul:
    #   z = T @ aatv + sigma * W @ Avt    ->   [Zr | Zi]
    tw = jnp.concatenate([t2[:M], t2[M:], w2[:M], w2[M:]], axis=1)          # (M, 2CN+2CK)
    z = jnp.dot(tw, r_ref[...], preferred_element_type=f32)                 # (M, 2CN)
    zr, zi = z[:, :CN], z[:, CN:]

    # conj(csm) * z, then coil-sum via a 0/1 summation matmul -> lane-dense out.
    pr = cr * zr + ci * zi
    pi = cr * zi - ci * zr
    p_lane = jnp.concatenate([pr, pi], axis=1)                              # (M, 2CN)
    o_ref[...] = jnp.dot(p_lane, s_ref[...], preferred_element_type=f32)    # (M, 2BN)


def at_forward(kx, ky, sigma, x, csm, noise):
    """Equivalent of At.forward(x, csm); noise passed explicitly (deterministic)."""
    B, ncoil, M, N = csm.shape
    K, Ky = noise.shape[-2:]
    f32 = jnp.float32

    Ah, Aht = get_a_at(kx, M)            # (K, M), (M, K)
    Av, Avt = get_a_at(ky, N)            # (Ky, N), (N, Ky)
    Av, Avt = Av.T, Avt.T                # (N, Ky), (Ky, N)

    # Tiny one-off operator products: leave to XLA (fuse with cos/sin build).
    atah = Aht @ Ah                      # (M, M) complex64
    aatv = Av @ Avt                      # (N, N) complex64

    P = B * ncoil
    CN, CK = P * N, P * Ky
    sig = jnp.asarray(sigma, f32)

    # --- operator construction (tiny, wrapper-side) --------------------------
    G2 = _real_block(atah)               # (2M, 2M)
    A2 = _real_block(Aht)                # (2M, 2K)

    eyeP = jnp.eye(P, dtype=f32)
    hr, hi = jnp.real(aatv).astype(f32), jnp.imag(aatv).astype(f32)
    vr, vi = jnp.real(Avt).astype(f32), jnp.imag(Avt).astype(f32)
    Hr, Hi = jnp.kron(eyeP, hr), jnp.kron(eyeP, hi)        # (CN, CN)
    Vr, Vi = jnp.kron(eyeP, vr), jnp.kron(eyeP, vi)        # (CK, CN)
    # Rows: [T_re; T_im; W_re; W_im]-space, cols: [Z_re | Z_im]; sigma folded in.
    R = jnp.concatenate([
        jnp.concatenate([Hr,  Hi], axis=1),
        jnp.concatenate([-Hi, Hr], axis=1),
        sig * jnp.concatenate([Vr,  Vi], axis=1),
        sig * jnp.concatenate([-Vi, Vr], axis=1),
    ], axis=0)                                             # (2CN+2CK, 2CN)

    # 0/1 coil-summation operator: (b, c, n) lanes -> (b, n) lanes.
    S = jnp.kron(jnp.kron(jnp.eye(B, dtype=f32), jnp.ones((ncoil, 1), f32)),
                 jnp.eye(N, dtype=f32))                    # (CN, B*N)
    zS = jnp.zeros_like(S)
    S2 = jnp.concatenate([jnp.concatenate([S, zS], axis=1),
                          jnp.concatenate([zS, S], axis=1)], axis=0)   # (2CN, 2BN)

    RepN = jnp.tile(jnp.eye(N, dtype=f32), (1, P))         # (N, CN) replication op

    # --- lane-dense data packing (pure layout plumbing) -----------------------
    split2 = lambda z: jnp.concatenate(
        [jnp.real(z).astype(f32), jnp.imag(z).astype(f32)], axis=0)
    x2 = split2(x)                                                        # (2M, N)
    csm2 = split2(jnp.transpose(csm, (2, 0, 1, 3)).reshape(M, CN))        # (2M, CN)
    noi2 = split2(jnp.transpose(noise, (2, 0, 1, 3)).reshape(K, CK))      # (2K, CK)

    kernel = functools.partial(_atb_kernel, M=M, CN=CN)

    # Whole problem (< 1 MiB) fits VMEM: single invocation, no grid, every
    # operand resident, output written once as one lane-dense (M, 2*B*N) slab.
    out = pl.pallas_call(
        kernel,
        out_shape=jax.ShapeDtypeStruct((M, 2 * B * N), f32),
    )(x2, RepN, csm2, noi2, G2, A2, R, S2)

    out_r = out[:, :B * N].reshape(M, B, N).transpose(1, 0, 2)
    out_i = out[:, B * N:].reshape(M, B, N).transpose(1, 0, 2)
    atb = (out_r + 1j * out_i).astype(jnp.complex64)
    return atah, aatv, atb


if __name__ == "__main__":
    B, ncoil, M, N = 2, 4, 16, 16
    K, Ky = 16, 16
    sigma = 0.01

    key = jax.random.PRNGKey(0)
    k1, k2, k3, k4, k5, k6 = jax.random.split(key, 6)

    # deterministic "parameter" init (k-space sampling locations), shape (K, 1)
    initx = (jnp.arange(K, dtype=jnp.float32) / K).reshape(K, 1)
    inity = (jnp.arange(Ky, dtype=jnp.float32) / Ky).reshape(Ky, 1)

    x = (jax.random.normal(k1, (M, N)) +
         1j * jax.random.normal(k2, (M, N))).astype(jnp.complex64)
    csm = (jax.random.normal(k3, (B, ncoil, M, N)) +
           1j * jax.random.normal(k4, (B, ncoil, M, N))).astype(jnp.complex64)
    # TODO(synk): torch.normal noise is not seed-reproducible in JAX; we draw an
    # equivalent deterministic complex Gaussian with jax.random instead.
    noise = (jax.random.normal(k5, (B, ncoil, K, Ky)) +
             1j * jax.random.normal(k6, (B, ncoil, K, Ky))).astype(jnp.complex64)

    fwd = jax.jit(at_forward)
    atah, aatv, atb = fwd(initx, inity, sigma, x, csm, noise)
    jax.block_until_ready((atah, aatv, atb))

    # plain-JAX reference (mirrors the torch module's op order exactly)
    Ah, Aht = get_a_at(initx, M)
    Av, Avt = get_a_at(inity, N)
    Av, Avt = Av.T, Avt.T
    atah_ref = Aht @ Ah
    aatv_ref = Av @ Avt
    xc = jnp.broadcast_to(x[None, None], csm.shape) * csm
    b_ref = jnp.einsum('km,bcmn,nq->bckq', Ah, xc, Av) + sigma * noise
    z_ref = jnp.einsum('mk,bckq,qn->bcmn', Aht, b_ref, Avt)
    atb_ref = jnp.sum(jnp.conj(csm) * z_ref, axis=1)

    assert jnp.allclose(atah, atah_ref, atol=1e-3, rtol=1e-3)
    assert jnp.allclose(aatv, aatv_ref, atol=1e-3, rtol=1e-3)
    assert jnp.allclose(atb, atb_ref, atol=1e-2, rtol=1e-2)
    print("KERNEL_OK")
</pallas_src>

<mosaic_0001>
module attributes {stable_mosaic.version = 11 : i64} {
  func.func @_atb_kernel(%arg0: memref<32x16xf32, #tpu.memory_space<vmem>>, %arg1: memref<16x128xf32, #tpu.memory_space<vmem>>, %arg2: memref<32x128xf32, #tpu.memory_space<vmem>>, %arg3: memref<32x128xf32, #tpu.memory_space<vmem>>, %arg4: memref<32x32xf32, #tpu.memory_space<vmem>>, %arg5: memref<32x32xf32, #tpu.memory_space<vmem>>, %arg6: memref<512x256xf32, #tpu.memory_space<vmem>>, %arg7: memref<256x64xf32, #tpu.memory_space<vmem>>, %arg8: memref<16x64xf32, #tpu.memory_space<vmem>>) attributes {dimension_semantics = [], scalar_prefetch = 0 : i64, scratch_operands = 0 : i64, tpu.core_type = #tpu.core_type<tc>} {
    %c0 = arith.constant 0 : index
    %c0_0 = arith.constant 0 : index
    %0 = vector.load %arg0[%c0, %c0_0] : memref<32x16xf32, #tpu.memory_space<vmem>>, vector<32x16xf32>
    %c0_1 = arith.constant 0 : index
    %c0_2 = arith.constant 0 : index
    %1 = vector.load %arg1[%c0_1, %c0_2] : memref<16x128xf32, #tpu.memory_space<vmem>>, vector<16x128xf32>
    %cst = arith.constant dense<0.000000e+00> : vector<32x128xf32>
    %2 = tpu.matmul %0, %1, %cst {dimension_numbers = #tpu.dot_dimension_numbers<[1], [0], [0], [1], [0, 0, 1, 1], [], []>} : vector<32x16xf32>, vector<16x128xf32>, vector<32x128xf32> -> vector<32x128xf32>
    %3 = vector.extract_strided_slice %2 {offsets = [0, 0], sizes = [16, 128], strides = [1, 1]} : vector<32x128xf32> to vector<16x128xf32>
    %4 = vector.extract_strided_slice %2 {offsets = [16, 0], sizes = [16, 128], strides = [1, 1]} : vector<32x128xf32> to vector<16x128xf32>
    %c0_3 = arith.constant 0 : index
    %c0_4 = arith.constant 0 : index
    %5 = vector.load %arg2[%c0_3, %c0_4] : memref<32x128xf32, #tpu.memory_space<vmem>>, vector<32x128xf32>
    %6 = vector.extract_strided_slice %5 {offsets = [0, 0], sizes = [16, 128], strides = [1, 1]} : vector<32x128xf32> to vector<16x128xf32>
    %7 = vector.extract_strided_slice %5 {offsets = [16, 0], sizes = [16, 128], strides = [1, 1]} : vector<32x128xf32> to vector<16x128xf32>
    %8 = arith.mulf %3, %6 : vector<16x128xf32>
    %9 = arith.mulf %4, %7 : vector<16x128xf32>
    %10 = arith.subf %8, %9 : vector<16x128xf32>
    %11 = arith.mulf %3, %7 : vector<16x128xf32>
    %12 = arith.mulf %4, %6 : vector<16x128xf32>
    %13 = arith.addf %11, %12 : vector<16x128xf32>
    %14 = tpu.concatenate %10, %13 in 0 : vector<16x128xf32>, vector<16x128xf32> -> vector<32x128xf32>
    %c0_5 = arith.constant 0 : index
    %c0_6 = arith.constant 0 : index
    %15 = vector.load %arg4[%c0_5, %c0_6] : memref<32x32xf32, #tpu.memory_space<vmem>>, vector<32x32xf32>
    %cst_7 = arith.constant dense<0.000000e+00> : vector<32x128xf32>
    %16 = tpu.matmul %15, %14, %cst_7 {dimension_numbers = #tpu.dot_dimension_numbers<[1], [0], [0], [1], [0, 0, 1, 1], [], []>} : vector<32x32xf32>, vector<32x128xf32>, vector<32x128xf32> -> vector<32x128xf32>
    %c0_8 = arith.constant 0 : index
    %c0_9 = arith.constant 0 : index
    %17 = vector.load %arg5[%c0_8, %c0_9] : memref<32x32xf32, #tpu.memory_space<vmem>>, vector<32x32xf32>
    %c0_10 = arith.constant 0 : index
    %c0_11 = arith.constant 0 : index
    %18 = vector.load %arg3[%c0_10, %c0_11] : memref<32x128xf32, #tpu.memory_space<vmem>>, vector<32x128xf32>
    %cst_12 = arith.constant dense<0.000000e+00> : vector<32x128xf32>
    %19 = tpu.matmul %17, %18, %cst_12 {dimension_numbers = #tpu.dot_dimension_numbers<[1], [0], [0], [1], [0, 0, 1, 1], [], []>} : vector<32x32xf32>, vector<32x128xf32>, vector<32x128xf32> -> vector<32x128xf32>
    %20 = vector.extract_strided_slice %16 {offsets = [0, 0], sizes = [16, 128], strides = [1, 1]} : vector<32x128xf32> to vector<16x128xf32>
    %21 = vector.extract_strided_slice %16 {offsets = [16, 0], sizes = [16, 128], strides = [1, 1]} : vector<32x128xf32> to vector<16x128xf32>
    %22 = vector.extract_strided_slice %19 {offsets = [0, 0], sizes = [16, 128], strides = [1, 1]} : vector<32x128xf32> to vector<16x128xf32>
    %23 = vector.extract_strided_slice %19 {offsets = [16, 0], sizes = [16, 128], strides = [1, 1]} : vector<32x128xf32> to vector<16x128xf32>
    %24 = tpu.concatenate %20, %21, %22, %23 in 1 : vector<16x128xf32>, vector<16x128xf32>, vector<16x128xf32>, vector<16x128xf32> -> vector<16x512xf32>
    %c0_13 = arith.constant 0 : index
    %c0_14 = arith.constant 0 : index
    %25 = vector.load %arg6[%c0_13, %c0_14] : memref<512x256xf32, #tpu.memory_space<vmem>>, vector<512x256xf32>
    %cst_15 = arith.constant dense<0.000000e+00> : vector<16x256xf32>
    %26 = tpu.matmul %24, %25, %cst_15 {dimension_numbers = #tpu.dot_dimension_numbers<[1], [0], [0], [1], [0, 0, 1, 1], [], []>} : vector<16x512xf32>, vector<512x256xf32>, vector<16x256xf32> -> vector<16x256xf32>
    %27 = vector.extract_strided_slice %26 {offsets = [0, 0], sizes = [16, 128], strides = [1, 1]} : vector<16x256xf32> to vector<16x128xf32>
    %28 = vector.extract_strided_slice %26 {offsets = [0, 128], sizes = [16, 128], strides = [1, 1]} : vector<16x256xf32> to vector<16x128xf32>
    %29 = arith.mulf %6, %27 : vector<16x128xf32>
    %30 = arith.mulf %7, %28 : vector<16x128xf32>
    %31 = arith.addf %29, %30 : vector<16x128xf32>
    %32 = arith.mulf %6, %28 : vector<16x128xf32>
    %33 = arith.mulf %7, %27 : vector<16x128xf32>
    %34 = arith.subf %32, %33 : vector<16x128xf32>
    %35 = tpu.concatenate %31, %34 in 1 : vector<16x128xf32>, vector<16x128xf32> -> vector<16x256xf32>
    %c0_16 = arith.constant 0 : index
    %c0_17 = arith.constant 0 : index
    %36 = vector.load %arg7[%c0_16, %c0_17] : memref<256x64xf32, #tpu.memory_space<vmem>>, vector<256x64xf32>
    %cst_18 = arith.constant dense<0.000000e+00> : vector<16x64xf32>
    %37 = tpu.matmul %35, %36, %cst_18 {dimension_numbers = #tpu.dot_dimension_numbers<[1], [0], [0], [1], [0, 0, 1, 1], [], []>} : vector<16x256xf32>, vector<256x64xf32>, vector<16x64xf32> -> vector<16x64xf32>
    %c0_19 = arith.constant 0 : index
    %c0_20 = arith.constant 0 : index
    %38 = vector.load %arg8[%c0_19, %c0_20] : memref<16x64xf32, #tpu.memory_space<vmem>>, vector<16x64xf32>
    tpu.vector_store %arg8[%c0_19, %c0_20], %37 {strides = array<i32>} : memref<16x64xf32, #tpu.memory_space<vmem>>, vector<16x64xf32>,
    return
  }
}

</mosaic_0001>

<llo_original>
// kernel: neg.11
$region0: #{neg.11}
  #allocation0 [shape = 's32[1]{0}', space=sflag, size = 0x4, scoped, tag = 'scoped memory for neg.11']
  %s0 = inlined_call_operand.vmem [shape: f32[128,128], index: 0, kind: input, shape index: {}]
  %s1 = inlined_call_operand.vmem [shape: f32[128,128], index: 1, kind: output, shape index: {}]
  %v2 = vld [vmem:[%s0] sm:$0xff]
  %3 = xla_tuple %v2
  %4 = xla_tuple %3
  %v5 = vxor.u32 %v2, 2147483648
  %6 = xla_tuple %v5
  %7 = vst [vmem:[%s1] sm:$0xff] %v5
  %s8 = scalar_lea.vmem %s0, 8
  %v9 = vld [vmem:[%s8] sm:$0xff]
  %10 = xla_tuple %v9
  %11 = xla_tuple %10
  %v12 = vxor.u32 %v9, 2147483648
  %13 = xla_tuple %v12
  %s14 = scalar_lea.vmem %s1, 8
  %15 = vst [vmem:[%s14] sm:$0xff] %v12
  %s16 = scalar_lea.vmem %s0, 16
  %v17 = vld [vmem:[%s16] sm:$0xff]
  %18 = xla_tuple %v17
  %19 = xla_tuple %18
  %v20 = vxor.u32 %v17, 2147483648
  %21 = xla_tuple %v20
  %s22 = scalar_lea.vmem %s1, 16
  %23 = vst [vmem:[%s22] sm:$0xff] %v20
  %s24 = scalar_lea.vmem %s0, 24
  %v25 = vld [vmem:[%s24] sm:$0xff]
  %26 = xla_tuple %v25
  %27 = xla_tuple %26
  %v28 = vxor.u32 %v25, 2147483648
  %29 = xla_tuple %v28
  %s30 = scalar_lea.vmem %s1, 24
  %31 = vst [vmem:[%s30] sm:$0xff] %v28
  %s32 = scalar_lea.vmem %s0, 32
  %v33 = vld [vmem:[%s32] sm:$0xff]
  %34 = xla_tuple %v33
  %35 = xla_tuple %34
  %v36 = vxor.u32 %v33, 2147483648
  %37 = xla_tuple %v36
  %s38 = scalar_lea.vmem %s1, 32
  %39 = vst [vmem:[%s38] sm:$0xff] %v36
  %s40 = scalar_lea.vmem %s0, 40
  %v41 = vld [vmem:[%s40] sm:$0xff]
  %42 = xla_tuple %v41
  %43 = xla_tuple %42
  %v44 = vxor.u32 %v41, 2147483648
  %45 = xla_tuple %v44
  %s46 = scalar_lea.vmem %s1, 40
  %47 = vst [vmem:[%s46] sm:$0xff] %v44
  %s48 = scalar_lea.vmem %s0, 48
  %v49 = vld [vmem:[%s48] sm:$0xff]
  %50 = xla_tuple %v49
  %51 = xla_tuple %50
  %v52 = vxor.u32 %v49, 2147483648
  %53 = xla_tuple %v52
  %s54 = scalar_lea.vmem %s1, 48
  %55 = vst [vmem:[%s54] sm:$0xff] %v52
  %s56 = scalar_lea.vmem %s0, 56
  %v57 = vld [vmem:[%s56] sm:$0xff]
  %58 = xla_tuple %v57
  %59 = xla_tuple %58
  %v60 = vxor.u32 %v57, 2147483648
  %61 = xla_tuple %v60
  %s62 = scalar_lea.vmem %s1, 56
  %63 = vst [vmem:[%s62] sm:$0xff] %v60
  %s64 = scalar_lea.vmem %s0, 64
  %v65 = vld [vmem:[%s64] sm:$0xff]
  %66 = xla_tuple %v65
  %67 = xla_tuple %66
  %v68 = vxor.u32 %v65, 2147483648
  %69 = xla_tuple %v68
  %s70 = scalar_lea.vmem %s1, 64
  %71 = vst [vmem:[%s70] sm:$0xff] %v68
  %s72 = scalar_lea.vmem %s0, 72
  %v73 = vld [vmem:[%s72] sm:$0xff]
  %74 = xla_tuple %v73
  %75 = xla_tuple %74
  %v76 = vxor.u32 %v73, 2147483648
  %77 = xla_tuple %v76
  %s78 = scalar_lea.vmem %s1, 72
  %79 = vst [vmem:[%s78] sm:$0xff] %v76
  %s80 = scalar_lea.vmem %s0, 80
  %v81 = vld [vmem:[%s80] sm:$0xff]
  %82 = xla_tuple %v81
  %83 = xla_tuple %82
  %v84 = vxor.u32 %v81, 2147483648
  %85 = xla_tuple %v84
  %s86 = scalar_lea.vmem %s1, 80
  %87 = vst [vmem:[%s86] sm:$0xff] %v84
  %s88 = scalar_lea.vmem %s0, 88
  %v89 = vld [vmem:[%s88] sm:$0xff]
  %90 = xla_tuple %v89
  %91 = xla_tuple %90
  %v92 = vxor.u32 %v89, 2147483648
  %93 = xla_tuple %v92
  %s94 = scalar_lea.vmem %s1, 88
  %95 = vst [vmem:[%s94] sm:$0xff] %v92
  %s96 = scalar_lea.vmem %s0, 96
  %v97 = vld [vmem:[%s96] sm:$0xff]
  %98 = xla_tuple %v97
  %99 = xla_tuple %98
  %v100 = vxor.u32 %v97, 2147483648
  %101 = xla_tuple %v100
  %s102 = scalar_lea.vmem %s1, 96
  %103 = vst [vmem:[%s102] sm:$0xff] %v100
  %s104 = scalar_lea.vmem %s0, 104
  %v105 = vld [vmem:[%s104] sm:$0xff]
  %106 = xla_tuple %v105
  %107 = xla_tuple %106
  %v108 = vxor.u32 %v105, 2147483648
  %109 = xla_tuple %v108
  %s110 = scalar_lea.vmem %s1, 104
  %111 = vst [vmem:[%s110] sm:$0xff] %v108
  %s112 = scalar_lea.vmem %s0, 112
  %v113 = vld [vmem:[%s112] sm:$0xff]
  %114 = xla_tuple %v113
  %115 = xla_tuple %114
  %v116 = vxor.u32 %v113, 2147483648
  %117 = xla_tuple %v116
  %s118 = scalar_lea.vmem %s1, 112
  %119 = vst [vmem:[%s118] sm:$0xff] %v116
  %s120 = scalar_lea.vmem %s0, 120
  %v121 = vld [vmem:[%s120] sm:$0xff]
  %122 = xla_tuple %v121
  %123 = xla_tuple %122
  %v124 = vxor.u32 %v121, 2147483648
  %125 = xla_tuple %v124
  %s126 = scalar_lea.vmem %s1, 120
  %127 = vst [vmem:[%s126] sm:$0xff] %v124

// kernel: custom-call.3
$region0: #{custom-call.3}
  %s0 = inlined_call_operand.hbm [shape: c64[2,4,16,16], index: 0, kind: input, shape index: {}]
  %s1 = inlined_call_operand.vmem [shape: f32[2,4,16,16], index: 1, kind: output, shape index: {}]
  %s2 = scalar_lea.hbm %s0, 128
  $region1: #{custom-call.3} parent=0
    #allocation0 [shape = 's32[1]{0}', space=sflag, size = 0x4, scoped, tag = 'scoped memory for custom-call.3']
    %3 = vsyncpa [#allocation0], 0
    %s5 = sshll.u32 %s2, 4
    %s6 = int_to_ptr.hbm [resolvable:$true] %s5
    %s7 = sshll.u32 %s1, 4
    %s8 = int_to_ptr.vmem [resolvable:$true] %s7
    %10 = dma.hbm_to_vmem [thread:$0]  %s6, 2048, %s8, [#allocation0]
    %12 = dma.done [#allocation0], 2048
    %13 = vsyncpa [#allocation0], 1

// kernel: tile.9
$region0: #{tile.9}
  %s0 = inlined_call_operand.vmem [shape: f32[16,8,16], index: 0, kind: input, shape index: {}]
  %s1 = inlined_call_operand.vmem [shape: f32[16,128], index: 1, kind: output, shape index: {}]
  %v2 = vld [vmem:[%s0] ss:$8 sm:$0xf]
  %v3 = vld [vmem:[%s0] ss:$8 sm:$0xf0]
  %vm4 = vcmask 1047556
  %v5 = vsel %vm4, %v3, %v2
  %vm6 = vcmask 130048
  %7 = vst.msk [vmem:[%s1] sm:$0xff] %vm6, %v5
  %s8 = scalar_lea.vmem %s0, 64
  %v9 = vld [vmem:[%s8] ss:$8 sm:$0xf]
  %s10 = scalar_lea.vmem %s0, 64
  %v11 = vld [vmem:[%s10] ss:$8 sm:$0xf0]
  %vm12 = vcmask 1047556
  %v13 = vsel %vm12, %v11, %v9
  %vm14 = vcmask 130048
  %s15 = scalar_lea.vmem %s1, 8
  %16 = vst.msk [vmem:[%s15] sm:$0xff] %vm14, %v13
  %s17 = scalar_lea.vmem %s0, 7
  %v18 = vld [vmem:[%s17] ss:$8 sm:$0xf]
  %s19 = scalar_lea.vmem %s0, 7
  %v20 = vld [vmem:[%s19] ss:$8 sm:$0xf0]
  %vm21 = vcmask 1047556
  %v22 = vsel %vm21, %v20, %v18
  %23 = vrot.lane.b32.xlu0 %v22, 112
  %v24 = vpop.permute.xlu0 %23
  %vm25 = vcmask 1048448
  %26 = vst.msk [vmem:[%s1] sm:$0xff] %vm25, %v24
  %s27 = scalar_lea.vmem %s0, 71
  %v28 = vld [vmem:[%s27] ss:$8 sm:$0xf]
  %s29 = scalar_lea.vmem %s0, 71
  %v30 = vld [vmem:[%s29] ss:$8 sm:$0xf0]
  %vm31 = vcmask 1047556
  %v32 = vsel %vm31, %v30, %v28
  %33 = vrot.lane.b32.xlu0 %v32, 112
  %v34 = vpop.permute.xlu0 %33
  %vm35 = vcmask 1048448
  %s36 = scalar_lea.vmem %s1, 8
  %37 = vst.msk [vmem:[%s36] sm:$0xff] %vm35, %v34
  %s38 = scalar_lea.vmem %s0, 6
  %v39 = vld [vmem:[%s38] ss:$8 sm:$0xf]
  %s40 = scalar_lea.vmem %s0, 6
  %v41 = vld [vmem:[%s40] ss:$8 sm:$0xf0]
  %vm42 = vcmask 1047556
  %v43 = vsel %vm42, %v41, %v39
  %44 = vrot.lane.b32.xlu0 %v43, 96
  %v45 = vpop.permute.xlu0 %44
  %vm46 = vcmask 917248
  %47 = vst.msk [vmem:[%s1] sm:$0xff] %vm46, %v45
  %s48 = scalar_lea.vmem %s0, 70
  %v49 = vld [vmem:[%s48] ss:$8 sm:$0xf]
  %s50 = scalar_lea.vmem %s0, 70
  %v51 = vld [vmem:[%s50] ss:$8 sm:$0xf0]
  %vm52 = vcmask 1047556
  %v53 = vsel %vm52, %v51, %v49
  %54 = vrot.lane.b32.xlu0 %v53, 96
  %v55 = vpop.permute.xlu0 %54
  %vm56 = vcmask 917248
  %s57 = scalar_lea.vmem %s1, 8
  %58 = vst.msk [vmem:[%s57] sm:$0xff] %vm56, %v55
  %s59 = scalar_lea.vmem %s0, 5
  %v60 = vld [vmem:[%s59] ss:$8 sm:$0xf]
  %s61 = scalar_lea.vmem %s0, 5
  %v62 = vld [vmem:[%s61] ss:$8 sm:$0xf0]
  %vm63 = vcmask 1047556
  %v64 = vsel %vm63, %v62, %v60
  %65 = vrot.lane.b32.xlu0 %v64, 80
  %v66 = vpop.permute.xlu0 %65
  %vm67 = vcmask 786048
  %68 = vst.msk [vmem:[%s1] sm:$0xff] %vm67, %v66
  %s69 = scalar_lea.vmem %s0, 69
  %v70 = vld [vmem:[%s69] ss:$8 sm:$0xf]
  %s71 = scalar_lea.vmem %s0, 69
  %v72 = vld [vmem:[%s71] ss:$8 sm:$0xf0]
  %vm73 = vcmask 1047556
  %v74 = vsel %vm73, %v72, %v70
  %75 = vrot.lane.b32.xlu0 %v74, 80
  %v76 = vpop.permute.xlu0 %75
  %vm77 = vcmask 786048
  %s78 = scalar_lea.vmem %s1, 8
  %79 = vst.msk [vmem:[%s78] sm:$0xff] %vm77, %v76
  %s80 = scalar_lea.vmem %s0, 4
  %v81 = vld [vmem:[%s80] ss:$8 sm:$0xf]
  %s82 = scalar_lea.vmem %s0, 4
  %v83 = vld [vmem:[%s82] ss:$8 sm:$0xf0]
  %vm84 = vcmask 1047556
  %v85 = vsel %vm84, %v83, %v81
  %86 = vrot.lane.b32.xlu0 %v85, 64
  %v87 = vpop.permute.xlu0 %86
  %vm88 = vcmask 654848
  %89 = vst.msk [vmem:[%s1] sm:$0xff] %vm88, %v87
  %s90 = scalar_lea.vmem %s0, 68
  %v91 = vld [vmem:[%s90] ss:$8 sm:$0xf]
  %s92 = scalar_lea.vmem %s0, 68
  %v93 = vld [vmem:[%s92] ss:$8 sm:$0xf0]
  %vm94 = vcmask 1047556
  %v95 = vsel %vm94, %v93, %v91
  %96 = vrot.lane.b32.xlu0 %v95, 64
  %v97 = vpop.permute.xlu0 %96
  %vm98 = vcmask 654848
  %s99 = scalar_lea.vmem %s1, 8
  %100 = vst.msk [vmem:[%s99] sm:$0xff] %vm98, %v97
  %s101 = scalar_lea.vmem %s0, 3
  %v102 = vld [vmem:[%s101] ss:$8 sm:$0xf]
  %s103 = scalar_lea.vmem %s0, 3
  %v104 = vld [vmem:[%s103] ss:$8 sm:$0xf0]
  %vm105 = vcmask 1047556
  %v106 = vsel %vm105, %v104, %v102
  %107 = vrot.lane.b32.xlu0 %v106, 48
  %v108 = vpop.permute.xlu0 %107
  %vm109 = vcmask 523648
  %110 = vst.msk [vmem:[%s1] sm:$0xff] %vm109, %v108
  %s111 = scalar_lea.vmem %s0, 67
  %v112 = vld [vmem:[%s111] ss:$8 sm:$0xf]
  %s113 = scalar_lea.vmem %s0, 67
  %v114 = vld [vmem:[%s113] ss:$8 sm:$0xf0]
  %vm115 = vcmask 1047556
  %v116 = vsel %vm115, %v114, %v112
  %117 = vrot.lane.b32.xlu0 %v116, 48
  %v118 = vpop.permute.xlu0 %117
  %vm119 = vcmask 523648
  %s120 = scalar_lea.vmem %s1, 8
  %121 = vst.msk [vmem:[%s120] sm:$0xff] %vm119, %v118
  %s122 = scalar_lea.vmem %s0, 2
  %v123 = vld [vmem:[%s122] ss:$8 sm:$0xf]
  %s124 = scalar_lea.vmem %s0, 2
  %v125 = vld [vmem:[%s124] ss:$8 sm:$0xf0]
  %vm126 = vcmask 1047556
  %v127 = vsel %vm126, %v125, %v123
  %128 = vrot.lane.b32.xlu0 %v127, 32
  %v129 = vpop.permute.xlu0 %128
  %vm130 = vcmask 392448
  %131 = vst.msk [vmem:[%s1] sm:$0xff] %vm130, %v129
  %s132 = scalar_lea.vmem %s0, 66
  %v133 = vld [vmem:[%s132] ss:$8 sm:$0xf]
  %s134 = scalar_lea.vmem %s0, 66
  %v135 = vld [vmem:[%s134] ss:$8 sm:$0xf0]
  %vm136 = vcmask 1047556
  %v137 = vsel %vm136, %v135, %v133
  %138 = vrot.lane.b32.xlu0 %v137, 32
  %v139 = vpop.permute.xlu0 %138
  %vm140 = vcmask 392448
  %s141 = scalar_lea.vmem %s1, 8
  %142 = vst.msk [vmem:[%s141] sm:$0xff] %vm140, %v139
  %s143 = scalar_lea.vmem %s0, 1
  %v144 = vld [vmem:[%s143] ss:$8 sm:$0xf]
  %s145 = scalar_lea.vmem %s0, 1
  %v146 = vld [vmem:[%s145] ss:$8 sm:$0xf0]
  %vm147 = vcmask 1047556
  %v148 = vsel %vm147, %v146, %v144
  %149 = vrot.lane.b32.xlu0 %v148, 16
  %v150 = vpop.permute.xlu0 %149
  %vm151 = vcmask 261248
  %152 = vst.msk [vmem:[%s1] sm:$0xff] %vm151, %v150
  %s153 = scalar_lea.vmem %s0, 65
  %v154 = vld [vmem:[%s153] ss:$8 sm:$0xf]
  %s155 = scalar_lea.vmem %s0, 65
  %v156 = vld [vmem:[%s155] ss:$8 sm:$0xf0]
  %vm157 = vcmask 1047556
  %v158 = vsel %vm157, %v156, %v154
  %159 = vrot.lane.b32.xlu0 %v158, 16
  %v160 = vpop.permute.xlu0 %159
  %vm161 = vcmask 261248
  %s162 = scalar_lea.vmem %s1, 8
  %163 = vst.msk [vmem:[%s162] sm:$0xff] %vm161, %v160

// kernel: custom-call.2
$region0: #{custom-call.2}
  %s0 = inlined_call_operand.hbm [shape: c64[2,4,16,16], index: 0, kind: input, shape index: {}]
  %s1 = inlined_call_operand.vmem [shape: f32[2,4,16,16], index: 1, kind: output, shape index: {}]
  $region1: #{custom-call.2} parent=0
    #allocation0 [shape = 's32[1]{0}', space=sflag, size = 0x4, scoped, tag = 'scoped memory for custom-call.2']
    %2 = vsyncpa [#allocation0], 0
    %s4 = sshll.u32 %s0, 4
    %s5 = int_to_ptr.hbm [resolvable:$true] %s4
    %s6 = sshll.u32 %s1, 4
    %s7 = int_to_ptr.vmem [resolvable:$true] %s6
    %9 = dma.hbm_to_vmem [thread:$0]  %s5, 2048, %s7, [#allocation0]
    %11 = dma.done [#allocation0], 2048
    %12 = vsyncpa [#allocation0], 1

// kernel: custom-call
$region0: #{custom-call}
  %s0 = inlined_call_operand.hbm [shape: c64[16,16], index: 0, kind: input, shape index: {}]
  %s1 = inlined_call_operand.vmem [shape: f32[16,16], index: 1, kind: output, shape index: {}]
  $region1: #{custom-call} parent=0
    #allocation0 [shape = 's32[1]{0}', space=sflag, size = 0x4, scoped, tag = 'scoped memory for custom-call']
    %2 = vsyncpa [#allocation0], 0
    %s4 = sshll.u32 %s0, 4
    %s5 = int_to_ptr.hbm [resolvable:$true] %s4
    %s6 = sshll.u32 %s1, 4
    %s7 = int_to_ptr.vmem [resolvable:$true] %s6
    %9 = dma.hbm_to_vmem [thread:$0]  %s5, 256, %s7, [#allocation0]
    %11 = dma.done [#allocation0], 256
    %12 = vsyncpa [#allocation0], 1

// kernel: custom-call.1
$region0: #{custom-call.1}
  %s0 = inlined_call_operand.hbm [shape: c64[16,16], index: 0, kind: input, shape index: {}]
  %s1 = inlined_call_operand.vmem [shape: f32[16,16], index: 1, kind: output, shape index: {}]
  %s2 = scalar_lea.hbm %s0, 16
  $region1: #{custom-call.1} parent=0
    #allocation0 [shape = 's32[1]{0}', space=sflag, size = 0x4, scoped, tag = 'scoped memory for custom-call.1']
    %3 = vsyncpa [#allocation0], 0
    %s5 = sshll.u32 %s2, 4
    %s6 = int_to_ptr.hbm [resolvable:$true] %s5
    %s7 = sshll.u32 %s1, 4
    %s8 = int_to_ptr.vmem [resolvable:$true] %s7
    %10 = dma.hbm_to_vmem [thread:$0]  %s6, 256, %s8, [#allocation0]
    %12 = dma.done [#allocation0], 256
    %13 = vsyncpa [#allocation0], 1

// kernel: custom-call.8
$region0: #{custom-call.8}
  %s0 = inlined_call_operand.vmem [shape: f32[2,16,16], index: 0, kind: input, shape index: {}]
  %s1 = inlined_call_operand.vmem [shape: f32[2,16,16], index: 1, kind: input, shape index: {}]
  %s2 = inlined_call_operand.hbm [shape: c64[2,16,16], index: 2, kind: output, shape index: {}]
  %s3 = scalar_lea.hbm %s2, 32
  $region1: #{custom-call.8} parent=0
    #allocation0 [shape = 's32[1]{0}', space=sflag, size = 0x4, scoped, tag = 'scoped memory for custom-call.8']
    %4 = vsyncpa [#allocation0], 0
    %s6 = sshll.u32 %s0, 4
    %s7 = int_to_ptr.vmem [resolvable:$true] %s6
    %s8 = sshll.u32 %s2, 4
    %s9 = int_to_ptr.hbm [resolvable:$true] %s8
    %11 = dma.vmem_to_hbm [thread:$0]  %s7, 512, %s9, [#allocation0]
    %13 = dma.done [#allocation0], 512
    %14 = vsyncpa [#allocation0], 1
  $region2: #{custom-call.8} parent=0
    #allocation1 [shape = 's32[1]{0}', space=sflag, size = 0x4, scoped, tag = 'scoped memory for custom-call.8']
    %15 = vsyncpa [#allocation1], 0
    %s17 = sshll.u32 %s1, 4
    %s18 = int_to_ptr.vmem [resolvable:$true] %s17
    %s19 = sshll.u32 %s3, 4
    %s20 = int_to_ptr.hbm [resolvable:$true] %s19
    %22 = dma.vmem_to_hbm [thread:$0]  %s18, 512, %s20, [#allocation1]
    %24 = dma.done [#allocation1], 512
    %25 = vsyncpa [#allocation1], 1

// kernel: custom-call.6
$region0: #{custom-call.6}
  %s0 = inlined_call_operand.vmem [shape: f32[16,16], index: 0, kind: input, shape index: {}]
  %s1 = inlined_call_operand.vmem [shape: f32[16,16], index: 1, kind: input, shape index: {}]
  %s2 = inlined_call_operand.hbm [shape: c64[16,16], index: 2, kind: output, shape index: {}]
  %s3 = scalar_lea.hbm %s2, 16
  $region1: #{custom-call.6} parent=0
    #allocation0 [shape = 's32[1]{0}', space=sflag, size = 0x4, scoped, tag = 'scoped memory for custom-call.6']
    %4 = vsyncpa [#allocation0], 0
    %s6 = sshll.u32 %s0, 4
    %s7 = int_to_ptr.vmem [resolvable:$true] %s6
    %s8 = sshll.u32 %s2, 4
    %s9 = int_to_ptr.hbm [resolvable:$true] %s8
    %11 = dma.vmem_to_hbm [thread:$0]  %s7, 256, %s9, [#allocation0]
    %13 = dma.done [#allocation0], 256
    %14 = vsyncpa [#allocation0], 1
  $region2: #{custom-call.6} parent=0
    #allocation1 [shape = 's32[1]{0}', space=sflag, size = 0x4, scoped, tag = 'scoped memory for custom-call.6']
    %15 = vsyncpa [#allocation1], 0
    %s17 = sshll.u32 %s1, 4
    %s18 = int_to_ptr.vmem [resolvable:$true] %s17
    %s19 = sshll.u32 %s3, 4
    %s20 = int_to_ptr.hbm [resolvable:$true] %s19
    %22 = dma.vmem_to_hbm [thread:$0]  %s18, 256, %s20, [#allocation1]
    %24 = dma.done [#allocation1], 256
    %25 = vsyncpa [#allocation1], 1

// kernel: at_forward.1
$region0: #{at_forward.1}
  #allocation0 [shape = 'u32[]', space=smem, size = 0x4, offset = 0x4, fixed_abs, tag = 'smem constant byte address 0x4 - core index']
  #allocation1 [shape = 'u32[72,128]{1,0:T(1,128)}', space=vmem, size = 0x9000, scoped, tag = 'internal scratch']
  %s0 = inlined_call_operand.vmem [shape: f32[32,16], index: 0, kind: input, shape index: {}]
  %s1 = inlined_call_operand.vmem [shape: f32[16,128], index: 1, kind: input, shape index: {}]
  %s2 = inlined_call_operand.vmem [shape: f32[32,128], index: 2, kind: input, shape index: {}]
  %s3 = inlined_call_operand.vmem [shape: f32[32,128], index: 3, kind: input, shape index: {}]
  %s4 = inlined_call_operand.vmem [shape: f32[32,32], index: 4, kind: input, shape index: {}]
  %s5 = inlined_call_operand.vmem [shape: f32[32,32], index: 5, kind: input, shape index: {}]
  %s6 = inlined_call_operand.vmem [shape: f32[512,256], index: 6, kind: input, shape index: {}]
  %s7 = inlined_call_operand.vmem [shape: f32[256,64], index: 7, kind: input, shape index: {}]
  %s8 = inlined_call_operand.vmem [shape: f32[16,64], index: 8, kind: output, shape index: {}]
  %s9 = sld [smem:[#allocation0]]
  $region42: #{at_forward.1} parent=0
    _
  %s11 = ssub.s32 1, %s9
  %s12 = scalar_select 0, %s11, %s9
  // Predicated region
  $region2: #{at_forward.1} parent=0 // pred_check
    _
  $region3: #{at_forward.1} parent=0 // pred_check_branch
    %14 = sbr.rel (0) target = $region5
  $region4: #{at_forward.1} parent=0 // pred_region
    _
  $region5: #{at_forward.1} parent=0 // pred_fallthru
    _
  // Predicated region
  $region6: #{at_forward.1} parent=0 // pred_check
    _
  $region7: #{at_forward.1} parent=0 // pred_check_branch
    %16 = sbr.rel (0) target = $region9
  $region8: #{at_forward.1} parent=0 // pred_region
    _
  $region9: #{at_forward.1} parent=0 // pred_fallthru
    _
  // Predicated region
  $region10: #{at_forward.1} parent=0 // pred_check
    _
  $region11: #{at_forward.1} parent=0 // pred_check_branch
    %18 = sbr.rel (0) target = $region13
  $region12: #{at_forward.1} parent=0 // pred_region
    _
  $region13: #{at_forward.1} parent=0 // pred_fallthru
    _
  // Predicated region
  $region14: #{at_forward.1} parent=0 // pred_check
    _
  $region15: #{at_forward.1} parent=0 // pred_check_branch
    %20 = sbr.rel (0) target = $region17
  $region16: #{at_forward.1} parent=0 // pred_region
    _
  $region17: #{at_forward.1} parent=0 // pred_fallthru
    _
  // Predicated region
  $region18: #{at_forward.1} parent=0 // pred_check
    _
  $region19: #{at_forward.1} parent=0 // pred_check_branch
    %22 = sbr.rel (0) target = $region21
  $region20: #{at_forward.1} parent=0 // pred_region
    _
  $region21: #{at_forward.1} parent=0 // pred_fallthru
    _
  // Predicated region
  $region22: #{at_forward.1} parent=0 // pred_check
    _
  $region23: #{at_forward.1} parent=0 // pred_check_branch
    %24 = sbr.rel (0) target = $region25
  $region24: #{at_forward.1} parent=0 // pred_region
    _
  $region25: #{at_forward.1} parent=0 // pred_fallthru
    _
  // Predicated region
  $region26: #{at_forward.1} parent=0 // pred_check
    _
  $region27: #{at_forward.1} parent=0 // pred_check_branch
    %26 = sbr.rel (0) target = $region29
  $region28: #{at_forward.1} parent=0 // pred_region
    _
  $region29: #{at_forward.1} parent=0 // pred_fallthru
    _
  // Predicated region
  $region30: #{at_forward.1} parent=0 // pred_check
    _
  $region31: #{at_forward.1} parent=0 // pred_check_branch
    %28 = sbr.rel (0) target = $region33
  $region32: #{at_forward.1} parent=0 // pred_region
    _
  $region33: #{at_forward.1} parent=0 // pred_fallthru
    _
  %v29 = vld [vmem:[%s0] sm:$0xff]
  %v30 = vld [vmem:[%s0 + $0x8] sm:$0xff]
  %v31 = vld [vmem:[%s0 + $0x10] sm:$0xff]
  %v32 = vld [vmem:[%s0 + $0x18] sm:$0xff]
  %v33 = vld [vmem:[%s1] sm:$0xff]
  %v34 = vld [vmem:[%s1 + $0x8] sm:$0xff]
  %vm35 = vcmask 130048
  %v37 = vsel %vm35, %v29, 0
  %v40 = vsel %vm35, %v30, 0
  %v43 = vsel %vm35, %v31, 0
  %v46 = vsel %vm35, %v32, 0
  %48 = vmatpush.msra.mxu0 0.0
  %49 = vmatpush.msra.mxu0 0.0
  %50 = vmatpush.msra.mxu0 0.0
  %51 = vmatpush.msra.mxu0 0.0
  %52 = vmatpush.msra.mxu0 0.0
  %53 = vmatpush.msra.mxu0 0.0
  %54 = vmatpush.msra.mxu0 0.0
  %55 = vmatpush.msra.mxu0 0.0
  %56 = vmatpush.msra.mxu0 0.0
  %57 = vmatpush.msra.mxu0 0.0
  %58 = vmatpush.msra.mxu0 0.0
  %59 = vmatpush.msra.mxu0 0.0
  %60 = vmatpush.msra.mxu0 0.0
  %61 = vmatpush.msra.mxu0 0.0
  %62 = vmatpush.msra.mxu0 %v34
  %63 = vmatpush.msra.mxu0 %v33
  %64 = vmatmul.f32.gmra.mxu0 %v37
  %v65 = vpop.f32.mrf.mxu0
  %v66 = vadd.f32 0.0, %v65
  %67 = vmatmul.f32.gmra.mxu0 %v40
  %v68 = vpop.f32.mrf.mxu0
  %v69 = vadd.f32 0.0, %v68
  %70 = vmatmul.f32.gmra.mxu0 %v43
  %v71 = vpop.f32.mrf.mxu0
  %v72 = vadd.f32 0.0, %v71
  %73 = vmatmul.f32.gmra.mxu0 %v46
  %v74 = vpop.f32.mrf.mxu0
  %v75 = vadd.f32 0.0, %v74
  %76 = vdwg.mxu0
  %v77 = vld [vmem:[%s2] sm:$0xff]
  %v78 = vld [vmem:[%s2 + $0x8] sm:$0xff]
  %v79 = vld [vmem:[%s2 + $0x10] sm:$0xff]
  %v80 = vld [vmem:[%s2 + $0x18] sm:$0xff]
  %v81 = vmul.f32 %v66, %v77
  %v82 = vmul.f32 %v69, %v78
  %v83 = vmul.f32 %v72, %v79
  %v84 = vmul.f32 %v75, %v80
  %v85 = vsub.f32 %v81, %v83
  %v86 = vsub.f32 %v82, %v84
  %v87 = vmul.f32 %v66, %v79
  %v88 = vmul.f32 %v69, %v80
  %v89 = vmul.f32 %v72, %v77
  %v90 = vmul.f32 %v75, %v78
  %v91 = vadd.f32 %v87, %v89
  %v92 = vadd.f32 %v88, %v90
  %v93 = vld [vmem:[%s4] sm:$0xff]
  %v94 = vld [vmem:[%s4 + $0x8] sm:$0xff]
  %v95 = vld [vmem:[%s4 + $0x10] sm:$0xff]
  %v96 = vld [vmem:[%s4 + $0x18] sm:$0xff]
  %vm97 = vcmask 261120
  %v99 = vsel %vm97, %v93, 0
  %v102 = vsel %vm97, %v94, 0
  %v105 = vsel %vm97, %v95, 0
  %v108 = vsel %vm97, %v96, 0
  %110 = vmatpush.msra.mxu0 0.0
  %111 = vmatpush.msra.mxu0 0.0
  %112 = vmatpush.msra.mxu0 0.0
  %113 = vmatpush.msra.mxu0 0.0
  %114 = vmatpush.msra.mxu0 0.0
  %115 = vmatpush.msra.mxu0 0.0
  %116 = vmatpush.msra.mxu0 0.0
  %117 = vmatpush.msra.mxu0 0.0
  %118 = vmatpush.msra.mxu0 0.0
  %119 = vmatpush.msra.mxu0 0.0
  %120 = vmatpush.msra.mxu0 0.0
  %121 = vmatpush.msra.mxu0 0.0
  %122 = vmatpush.msra.mxu0 %v92
  %123 = vmatpush.msra.mxu0 %v91
  %124 = vmatpush.msra.mxu0 %v86
  %125 = vmatpush.msra.mxu0 %v85
  %126 = vmatmul.f32.gmra.mxu0 %v99
  %v127 = vpop.f32.mrf.mxu0
  %v128 = vadd.f32 0.0, %v127
  %129 = vmatmul.f32.gmra.mxu0 %v102
  %v130 = vpop.f32.mrf.mxu0
  %v131 = vadd.f32 0.0, %v130
  %132 = vmatmul.f32.gmra.mxu0 %v105
  %v133 = vpop.f32.mrf.mxu0
  %v134 = vadd.f32 0.0, %v133
  %135 = vmatmul.f32.gmra.mxu0 %v108
  %v136 = vpop.f32.mrf.mxu0
  %v137 = vadd.f32 0.0, %v136
  %138 = vdwg.mxu0
  %v139 = vld [vmem:[%s5] sm:$0xff]
  %v140 = vld [vmem:[%s5 + $0x8] sm:$0xff]
  %v141 = vld [vmem:[%s5 + $0x10] sm:$0xff]
  %v142 = vld [vmem:[%s5 + $0x18] sm:$0xff]
  %v143 = vld [vmem:[%s3] sm:$0xff]
  %v144 = vld [vmem:[%s3 + $0x8] sm:$0xff]
  %v145 = vld [vmem:[%s3 + $0x10] sm:$0xff]
  %v146 = vld [vmem:[%s3 + $0x18] sm:$0xff]
  %v148 = vsel %vm97, %v139, 0
  %v151 = vsel %vm97, %v140, 0
  %v154 = vsel %vm97, %v141, 0
  %v157 = vsel %vm97, %v142, 0
  %159 = vmatpush.msra.mxu0 0.0
  %160 = vmatpush.msra.mxu0 0.0
  %161 = vmatpush.msra.mxu0 0.0
  %162 = vmatpush.msra.mxu0 0.0
  %163 = vmatpush.msra.mxu0 0.0
  %164 = vmatpush.msra.mxu0 0.0
  %165 = vmatpush.msra.mxu0 0.0
  %166 = vmatpush.msra.mxu0 0.0
  %167 = vmatpush.msra.mxu0 0.0
  %168 = vmatpush.msra.mxu0 0.0
  %169 = vmatpush.msra.mxu0 0.0
  %170 = vmatpush.msra.mxu0 0.0
  %171 = vmatpush.msra.mxu0 %v146
  %172 = vmatpush.msra.mxu0 %v145
  %173 = vmatpush.msra.mxu0 %v144
  %174 = vmatpush.msra.mxu0 %v143
  %175 = vmatmul.f32.gmra.mxu0 %v148
  %v176 = vpop.f32.mrf.mxu0
  %v177 = vadd.f32 0.0, %v176
  %178 = vmatmul.f32.gmra.mxu0 %v151
  %v179 = vpop.f32.mrf.mxu0
  %v180 = vadd.f32 0.0, %v179
  %181 = vmatmul.f32.gmra.mxu0 %v154
  %v182 = vpop.f32.mrf.mxu0
  %v183 = vadd.f32 0.0, %v182
  %184 = vmatmul.f32.gmra.mxu0 %v157
  %v185 = vpop.f32.mrf.mxu0
  %v186 = vadd.f32 0.0, %v185
  %187 = vdwg.mxu0
  %v188 = vld [vmem:[%s6] sm:$0xff]
  %v189 = vld [vmem:[%s6 + $0x8] sm:$0xff]
  %v190 = vld [vmem:[%s6 + $0x10] sm:$0xff]
  %v191 = vld [vmem:[%s6 + $0x18] sm:$0xff]
  %v192 = vld [vmem:[%s6 + $0x20] sm:$0xff]
  %v193 = vld [vmem:[%s6 + $0x28] sm:$0xff]
  %v194 = vld [vmem:[%s6 + $0x30] sm:$0xff]
  %v195 = vld [vmem:[%s6 + $0x38] sm:$0xff]
  %v196 = vld [vmem:[%s6 + $0x40] sm:$0xff]
  %v197 = vld [vmem:[%s6 + $0x48] sm:$0xff]
  %v198 = vld [vmem:[%s6 + $0x50] sm:$0xff]
  %v199 = vld [vmem:[%s6 + $0x58] sm:$0xff]
  %v200 = vld [vmem:[%s6 + $0x60] sm:$0xff]
  %v201 = vld [vmem:[%s6 + $0x68] sm:$0xff]
  %v202 = vld [vmem:[%s6 + $0x70] sm:$0xff]
  %v203 = vld [vmem:[%s6 + $0x78] sm:$0xff]
  %v204 = vld [vmem:[%s6 + $0x80] sm:$0xff]
  %v205 = vld [vmem:[%s6 + $0x88] sm:$0xff]
  %v206 = vld [vmem:[%s6 + $0x90] sm:$0xff]
  %v207 = vld [vmem:[%s6 + $0x98] sm:$0xff]
  %v208 = vld [vmem:[%s6 + $0xa0] sm:$0xff]
  %v209 = vld [vmem:[%s6 + $0xa8] sm:$0xff]
  %v210 = vld [vmem:[%s6 + $0xb0] sm:$0xff]
  %v211 = vld [vmem:[%s6 + $0xb8] sm:$0xff]
  %v212 = vld [vmem:[%s6 + $0xc0] sm:$0xff]
  %v213 = vld [vmem:[%s6 + $0xc8] sm:$0xff]
  %v214 = vld [vmem:[%s6 + $0xd0] sm:$0xff]
  %v215 = vld [vmem:[%s6 + $0xd8] sm:$0xff]
  %v216 = vld [vmem:[%s6 + $0xe0] sm:$0xff]
  %v217 = vld [vmem:[%s6 + $0xe8] sm:$0xff]
  %v218 = vld [vmem:[%s6 + $0xf0] sm:$0xff]
  %v219 = vld [vmem:[%s6 + $0xf8] sm:$0xff]
  %v220 = vld [vmem:[%s6 + $0x100] sm:$0xff]
  %v221 = vld [vmem:[%s6 + $0x108] sm:$0xff]
  %v222 = vld [vmem:[%s6 + $0x110] sm:$0xff]
  %v223 = vld [vmem:[%s6 + $0x118] sm:$0xff]
  %v224 = vld [vmem:[%s6 + $0x120] sm:$0xff]
  %v225 = vld [vmem:[%s6 + $0x128] sm:$0xff]
  %v226 = vld [vmem:[%s6 + $0x130] sm:$0xff]
  %v227 = vld [vmem:[%s6 + $0x138] sm:$0xff]
  %v228 = vld [vmem:[%s6 + $0x140] sm:$0xff]
  %v229 = vld [vmem:[%s6 + $0x148] sm:$0xff]
  %v230 = vld [vmem:[%s6 + $0x150] sm:$0xff]
  %v231 = vld [vmem:[%s6 + $0x158] sm:$0xff]
  %v232 = vld [vmem:[%s6 + $0x160] sm:$0xff]
  %v233 = vld [vmem:[%s6 + $0x168] sm:$0xff]
  %v234 = vld [vmem:[%s6 + $0x170] sm:$0xff]
  %v235 = vld [vmem:[%s6 + $0x178] sm:$0xff]
  %v236 = vld [vmem:[%s6 + $0x180] sm:$0xff]
  %v237 = vld [vmem:[%s6 + $0x188] sm:$0xff]
  %v238 = vld [vmem:[%s6 + $0x190] sm:$0xff]
  %v239 = vld [vmem:[%s6 + $0x198] sm:$0xff]
  %v240 = vld [vmem:[%s6 + $0x1a0] sm:$0xff]
  %v241 = vld [vmem:[%s6 + $0x1a8] sm:$0xff]
  %v242 = vld [vmem:[%s6 + $0x1b0] sm:$0xff]
  %v243 = vld [vmem:[%s6 + $0x1b8] sm:$0xff]
  %v244 = vld [vmem:[%s6 + $0x1c0] sm:$0xff]
  %v245 = vld [vmem:[%s6 + $0x1c8] sm:$0xff]
  %v246 = vld [vmem:[%s6 + $0x1d0] sm:$0xff]
  %v247 = vld [vmem:[%s6 + $0x1d8] sm:$0xff]
  %v248 = vld [vmem:[%s6 + $0x1e0] sm:$0xff]
  %v249 = vld [vmem:[%s6 + $0x1e8] sm:$0xff]
  %v250 = vld [vmem:[%s6 + $0x1f0] sm:$0xff]
  %v251 = vld [vmem:[%s6 + $0x1f8] sm:$0xff]
  %v252 = vld [vmem:[%s6 + $0x200] sm:$0xff]
  %v253 = vld [vmem:[%s6 + $0x208] sm:$0xff]
  %v254 = vld [vmem:[%s6 + $0x210] sm:$0xff]
  %v255 = vld [vmem:[%s6 + $0x218] sm:$0xff]
  %v256 = vld [vmem:[%s6 + $0x220] sm:$0xff]
  %v257 = vld [vmem:[%s6 + $0x228] sm:$0xff]
  %v258 = vld [vmem:[%s6 + $0x230] sm:$0xff]
  %v259 = vld [vmem:[%s6 + $0x238] sm:$0xff]
  %v260 = vld [vmem:[%s6 + $0x240] sm:$0xff]
  %v261 = vld [vmem:[%s6 + $0x248] sm:$0xff]
  %v262 = vld [vmem:[%s6 + $0x250] sm:$0xff]
  %v263 = vld [vmem:[%s6 + $0x258] sm:$0xff]
  %v264 = vld [vmem:[%s6 + $0x260] sm:$0xff]
  %v265 = vld [vmem:[%s6 + $0x268] sm:$0xff]
  %v266 = vld [vmem:[%s6 + $0x270] sm:$0xff]
  %v267 = vld [vmem:[%s6 + $0x278] sm:$0xff]
  %v268 = vld [vmem:[%s6 + $0x280] sm:$0xff]
  %v269 = vld [vmem:[%s6 + $0x288] sm:$0xff]
  %v270 = vld [vmem:[%s6 + $0x290] sm:$0xff]
  %v271 = vld [vmem:[%s6 + $0x298] sm:$0xff]
  %v272 = vld [vmem:[%s6 + $0x2a0] sm:$0xff]
  %v273 = vld [vmem:[%s6 + $0x2a8] sm:$0xff]
  %v274 = vld [vmem:[%s6 + $0x2b0] sm:$0xff]
  %v275 = vld [vmem:[%s6 + $0x2b8] sm:$0xff]
  %v276 = vld [vmem:[%s6 + $0x2c0] sm:$0xff]
  %v277 = vld [vmem:[%s6 + $0x2c8] sm:$0xff]
  %v278 = vld [vmem:[%s6 + $0x2d0] sm:$0xff]
  %v279 = vld [vmem:[%s6 + $0x2d8] sm:$0xff]
  %v280 = vld [vmem:[%s6 + $0x2e0] sm:$0xff]
  %v281 = vld [vmem:[%s6 + $0x2e8] sm:$0xff]
  %v282 = vld [vmem:[%s6 + $0x2f0] sm:$0xff]
  %v283 = vld [vmem:[%s6 + $0x2f8] sm:$0xff]
  %v284 = vld [vmem:[%s6 + $0x300] sm:$0xff]
  %v285 = vld [vmem:[%s6 + $0x308] sm:$0xff]
  %v286 = vld [vmem:[%s6 + $0x310] sm:$0xff]
  %v287 = vld [vmem:[%s6 + $0x318] sm:$0xff]
  %v288 = vld [vmem:[%s6 + $0x320] sm:$0xff]
  %v289 = vld [vmem:[%s6 + $0x328] sm:$0xff]
  %v290 = vld [vmem:[%s6 + $0x330] sm:$0xff]
  %v291 = vld [vmem:[%s6 + $0x338] sm:$0xff]
  %v292 = vld [vmem:[%s6 + $0x340] sm:$0xff]
  %v293 = vld [vmem:[%s6 + $0x348] sm:$0xff]
  %v294 = vld [vmem:[%s6 + $0x350] sm:$0xff]
  %v295 = vld [vmem:[%s6 + $0x358] sm:$0xff]
  %v296 = vld [vmem:[%s6 + $0x360] sm:$0xff]
  %v297 = vld [vmem:[%s6 + $0x368] sm:$0xff]
  %v298 = vld [vmem:[%s6 + $0x370] sm:$0xff]
  %v299 = vld [vmem:[%s6 + $0x378] sm:$0xff]
  %v300 = vld [vmem:[%s6 + $0x380] sm:$0xff]
  %v301 = vld [vmem:[%s6 + $0x388] sm:$0xff]
  %v302 = vld [vmem:[%s6 + $0x390] sm:$0xff]
  %v303 = vld [vmem:[%s6 + $0x398] sm:$0xff]
  %v304 = vld [vmem:[%s6 + $0x3a0] sm:$0xff]
  %v305 = vld [vmem:[%s6 + $0x3a8] sm:$0xff]
  %v306 = vld [vmem:[%s6 + $0x3b0] sm:$0xff]
  %v307 = vld [vmem:[%s6 + $0x3b8] sm:$0xff]
  %v308 = vld [vmem:[%s6 + $0x3c0] sm:$0xff]
  %v309 = vld [vmem:[%s6 + $0x3c8] sm:$0xff]
  %v310 = vld [vmem:[%s6 + $0x3d0] sm:$0xff]
  %v311 = vld [vmem:[%s6 + $0x3d8] sm:$0xff]
  %v312 = vld [vmem:[%s6 + $0x3e0] sm:$0xff]
  %v313 = vld [vmem:[%s6 + $0x3e8] sm:$0xff]
  %v314 = vld [vmem:[%s6 + $0x3f0] sm:$0xff]
  %v315 = vld [vmem:[%s6 + $0x3f8] sm:$0xff]
  %316 = vmatpush.msra.mxu0 %v218
  %317 = vmatpush.msra.mxu0 %v216
  %318 = vmatpush.msra.mxu0 %v214
  %319 = vmatpush.msra.mxu0 %v212
  %320 = vmatpush.msra.mxu0 %v210
  %321 = vmatpush.msra.mxu0 %v208
  %322 = vmatpush.msra.mxu0 %v206
  %323 = vmatpush.msra.mxu0 %v204
  %324 = vmatpush.msra.mxu0 %v202
  %325 = vmatpush.msra.mxu0 %v200
  %326 = vmatpush.msra.mxu0 %v198
  %327 = vmatpush.msra.mxu0 %v196
  %328 = vmatpush.msra.mxu0 %v194
  %329 = vmatpush.msra.mxu0 %v192
  %330 = vmatpush.msra.mxu0 %v190
  %331 = vmatpush.msra.mxu0 %v188
  %332 = vmatmul.f32.gmra.mxu0 %v128
  %v333 = vpop.f32.mrf.mxu0
  %v334 = vadd.f32 0.0, %v333
  %335 = vmatmul.f32.gmra.mxu0 %v131
  %v336 = vpop.f32.mrf.mxu0
  %v337 = vadd.f32 0.0, %v336
  %338 = vdwg.mxu0
  %339 = vmatpush.msra.mxu0 %v250
  %340 = vmatpush.msra.mxu0 %v248
  %341 = vmatpush.msra.mxu0 %v246
  %342 = vmatpush.msra.mxu0 %v244
  %343 = vmatpush.msra.mxu0 %v242
  %344 = vmatpush.msra.mxu0 %v240
  %345 = vmatpush.msra.mxu0 %v238
  %346 = vmatpush.msra.mxu0 %v236
  %347 = vmatpush.msra.mxu0 %v234
  %348 = vmatpush.msra.mxu0 %v232
  %349 = vmatpush.msra.mxu0 %v230
  %350 = vmatpush.msra.mxu0 %v228
  %351 = vmatpush.msra.mxu0 %v226
  %352 = vmatpush.msra.mxu0 %v224
  %353 = vmatpush.msra.mxu0 %v222
  %354 = vmatpush.msra.mxu0 %v220
  %355 = vmatmul.f32.gmra.mxu0 %v134
  %v356 = vpop.f32.mrf.mxu0
  %v357 = vadd.f32 %v334, %v356
  %358 = vmatmul.f32.gmra.mxu0 %v137
  %v359 = vpop.f32.mrf.mxu0
  %v360 = vadd.f32 %v337, %v359
  %361 = vdwg.mxu0
  %362 = vmatpush.msra.mxu0 %v282
  %363 = vmatpush.msra.mxu0 %v280
  %364 = vmatpush.msra.mxu0 %v278
  %365 = vmatpush.msra.mxu0 %v276
  %366 = vmatpush.msra.mxu0 %v274
  %367 = vmatpush.msra.mxu0 %v272
  %368 = vmatpush.msra.mxu0 %v270
  %369 = vmatpush.msra.mxu0 %v268
  %370 = vmatpush.msra.mxu0 %v266
  %371 = vmatpush.msra.mxu0 %v264
  %372 = vmatpush.msra.mxu0 %v262
  %373 = vmatpush.msra.mxu0 %v260
  %374 = vmatpush.msra.mxu0 %v258
  %375 = vmatpush.msra.mxu0 %v256
  %376 = vmatpush.msra.mxu0 %v254
  %377 = vmatpush.msra.mxu0 %v252
  %378 = vmatmul.f32.gmra.mxu0 %v177
  %v379 = vpop.f32.mrf.mxu0
  %v380 = vadd.f32 %v357, %v379
  %381 = vmatmul.f32.gmra.mxu0 %v180
  %v382 = vpop.f32.mrf.mxu0
  %v383 = vadd.f32 %v360, %v382
  %384 = vdwg.mxu0
  %385 = vmatpush.msra.mxu0 %v314
  %386 = vmatpush.msra.mxu0 %v312
  %387 = vmatpush.msra.mxu0 %v310
  %388 = vmatpush.msra.mxu0 %v308
  %389 = vmatpush.msra.mxu0 %v306
  %390 = vmatpush.msra.mxu0 %v304
  %391 = vmatpush.msra.mxu0 %v302
  %392 = vmatpush.msra.mxu0 %v300
  %393 = vmatpush.msra.mxu0 %v298
  %394 = vmatpush.msra.mxu0 %v296
  %395 = vmatpush.msra.mxu0 %v294
  %396 = vmatpush.msra.mxu0 %v292
  %397 = vmatpush.msra.mxu0 %v290
  %398 = vmatpush.msra.mxu0 %v288
  %399 = vmatpush.msra.mxu0 %v286
  %400 = vmatpush.msra.mxu0 %v284
  %401 = vmatmul.f32.gmra.mxu0 %v183
  %v402 = vpop.f32.mrf.mxu0
  %v403 = vadd.f32 %v380, %v402
  %404 = vmatmul.f32.gmra.mxu0 %v186
  %v405 = vpop.f32.mrf.mxu0
  %v406 = vadd.f32 %v383, %v405
  %407 = vdwg.mxu0
  %408 = vmatpush.msra.mxu0 %v219
  %409 = vmatpush.msra.mxu0 %v217
  %410 = vmatpush.msra.mxu0 %v215
  %411 = vmatpush.msra.mxu0 %v213
  %412 = vmatpush.msra.mxu0 %v211
  %413 = vmatpush.msra.mxu0 %v209
  %414 = vmatpush.msra.mxu0 %v207
  %415 = vmatpush.msra.mxu0 %v205
  %416 = vmatpush.msra.mxu0 %v203
  %417 = vmatpush.msra.mxu0 %v201
  %418 = vmatpush.msra.mxu0 %v199
  %419 = vmatpush.msra.mxu0 %v197
  %420 = vmatpush.msra.mxu0 %v195
  %421 = vmatpush.msra.mxu0 %v193
  %422 = vmatpush.msra.mxu0 %v191
  %423 = vmatpush.msra.mxu0 %v189
  %424 = vmatmul.f32.gmra.mxu0 %v128
  %v425 = vpop.f32.mrf.mxu0
  %v426 = vadd.f32 0.0, %v425
  %427 = vmatmul.f32.gmra.mxu0 %v131
  %v428 = vpop.f32.mrf.mxu0
  %v429 = vadd.f32 0.0, %v428
  %430 = vdwg.mxu0
  %431 = vmatpush.msra.mxu0 %v251
  %432 = vmatpush.msra.mxu0 %v249
  %433 = vmatpush.msra.mxu0 %v247
  %434 = vmatpush.msra.mxu0 %v245
  %435 = vmatpush.msra.mxu0 %v243
  %436 = vmatpush.msra.mxu0 %v241
  %437 = vmatpush.msra.mxu0 %v239
  %438 = vmatpush.msra.mxu0 %v237
  %439 = vmatpush.msra.mxu0 %v235
  %440 = vmatpush.msra.mxu0 %v233
  %441 = vmatpush.msra.mxu0 %v231
  %442 = vmatpush.msra.mxu0 %v229
  %443 = vmatpush.msra.mxu0 %v227
  %444 = vmatpush.msra.mxu0 %v225
  %445 = vmatpush.msra.mxu0 %v223
  %446 = vmatpush.msra.mxu0 %v221
  %447 = vmatmul.f32.gmra.mxu0 %v134
  %v448 = vpop.f32.mrf.mxu0
  %v449 = vadd.f32 %v426, %v448
  %450 = vmatmul.f32.gmra.mxu0 %v137
  %v451 = vpop.f32.mrf.mxu0
  %v452 = vadd.f32 %v429, %v451
  %453 = vdwg.mxu0
  %454 = vmatpush.msra.mxu0 %v283
  %455 = vmatpush.msra.mxu0 %v281
  %456 = vmatpush.msra.mxu0 %v279
  %457 = vmatpush.msra.mxu0 %v277
  %458 = vmatpush.msra.mxu0 %v275
  %459 = vmatpush.msra.mxu0 %v273
  %460 = vmatpush.msra.mxu0 %v271
  %461 = vmatpush.msra.mxu0 %v269
  %462 = vmatpush.msra.mxu0 %v267
  %463 = vmatpush.msra.mxu0 %v265
  %464 = vmatpush.msra.mxu0 %v263
  %465 = vmatpush.msra.mxu0 %v261
  %466 = vmatpush.msra.mxu0 %v259
  %467 = vmatpush.msra.mxu0 %v257
  %468 = vmatpush.msra.mxu0 %v255
  %469 = vmatpush.msra.mxu0 %v253
  %470 = vmatmul.f32.gmra.mxu0 %v177
  %v471 = vpop.f32.mrf.mxu0
  %v472 = vadd.f32 %v449, %v471
  %473 = vmatmul.f32.gmra.mxu0 %v180
  %v474 = vpop.f32.mrf.mxu0
  %v475 = vadd.f32 %v452, %v474
  %476 = vdwg.mxu0
  %477 = vmatpush.msra.mxu0 %v315
  %478 = vmatpush.msra.mxu0 %v313
  %479 = vmatpush.msra.mxu0 %v311
  %480 = vmatpush.msra.mxu0 %v309
  %481 = vmatpush.msra.mxu0 %v307
  %482 = vmatpush.msra.mxu0 %v305
  %483 = vmatpush.msra.mxu0 %v303
  %484 = vmatpush.msra.mxu0 %v301
  %485 = vmatpush.msra.mxu0 %v299
  %486 = vmatpush.msra.mxu0 %v297
  %487 = vmatpush.msra.mxu0 %v295
  %488 = vmatpush.msra.mxu0 %v293
  %489 = vmatpush.msra.mxu0 %v291
  %490 = vmatpush.msra.mxu0 %v289
  %491 = vmatpush.msra.mxu0 %v287
  %492 = vmatpush.msra.mxu0 %v285
  %493 = vmatmul.f32.gmra.mxu0 %v183
  %v494 = vpop.f32.mrf.mxu0
  %v495 = vadd.f32 %v472, %v494
  %496 = vmatmul.f32.gmra.mxu0 %v186
  %v497 = vpop.f32.mrf.mxu0
  %v498 = vadd.f32 %v475, %v497
  %499 = vdwg.mxu0
  %v500 = vmul.f32 %v77, %v403
  %v501 = vmul.f32 %v78, %v406
  %v502 = vmul.f32 %v79, %v495
  %v503 = vmul.f32 %v80, %v498
  %v504 = vadd.f32 %v500, %v502
  %v505 = vadd.f32 %v501, %v503
  %v506 = vmul.f32 %v77, %v495
  %v507 = vmul.f32 %v78, %v498
  %v508 = vmul.f32 %v79, %v403
  %v509 = vmul.f32 %v80, %v406
  %v510 = vsub.f32 %v506, %v508
  %v511 = vsub.f32 %v507, %v509
  %v512 = vld [vmem:[%s7] sm:$0xff]
  %v513 = vld [vmem:[%s7 + $0x8] sm:$0xff]
  %v514 = vld [vmem:[%s7 + $0x10] sm:$0xff]
  %v515 = vld [vmem:[%s7 + $0x18] sm:$0xff]
  %v516 = vld [vmem:[%s7 + $0x20] sm:$0xff]
  %v517 = vld [vmem:[%s7 + $0x28] sm:$0xff]
  %v518 = vld [vmem:[%s7 + $0x30] sm:$0xff]
  %v519 = vld [vmem:[%s7 + $0x38] sm:$0xff]
  %v520 = vld [vmem:[%s7 + $0x40] sm:$0xff]
  %v521 = vld [vmem:[%s7 + $0x48] sm:$0xff]
  %v522 = vld [vmem:[%s7 + $0x50] sm:$0xff]
  %v523 = vld [vmem:[%s7 + $0x58] sm:$0xff]
  %v524 = vld [vmem:[%s7 + $0x60] sm:$0xff]
  %v525 = vld [vmem:[%s7 + $0x68] sm:$0xff]
  %v526 = vld [vmem:[%s7 + $0x70] sm:$0xff]
  %v527 = vld [vmem:[%s7 + $0x78] sm:$0xff]
  %v528 = vld [vmem:[%s7 + $0x80] sm:$0xff]
  %v529 = vld [vmem:[%s7 + $0x88] sm:$0xff]
  %v530 = vld [vmem:[%s7 + $0x90] sm:$0xff]
  %v531 = vld [vmem:[%s7 + $0x98] sm:$0xff]
  %v532 = vld [vmem:[%s7 + $0xa0] sm:$0xff]
  %v533 = vld [vmem:[%s7 + $0xa8] sm:$0xff]
  %v534 = vld [vmem:[%s7 + $0xb0] sm:$0xff]
  %v535 = vld [vmem:[%s7 + $0xb8] sm:$0xff]
  %v536 = vld [vmem:[%s7 + $0xc0] sm:$0xff]
  %v537 = vld [vmem:[%s7 + $0xc8] sm:$0xff]
  %v538 = vld [vmem:[%s7 + $0xd0] sm:$0xff]
  %v539 = vld [vmem:[%s7 + $0xd8] sm:$0xff]
  %v540 = vld [vmem:[%s7 + $0xe0] sm:$0xff]
  %v541 = vld [vmem:[%s7 + $0xe8] sm:$0xff]
  %v542 = vld [vmem:[%s7 + $0xf0] sm:$0xff]
  %v543 = vld [vmem:[%s7 + $0xf8] sm:$0xff]
  %544 = vmatpush.msra.mxu0 %v527
  %545 = vmatpush.msra.mxu0 %v526
  %546 = vmatpush.msra.mxu0 %v525
  %547 = vmatpush.msra.mxu0 %v524
  %548 = vmatpush.msra.mxu0 %v523
  %549 = vmatpush.msra.mxu0 %v522
  %550 = vmatpush.msra.mxu0 %v521
  %551 = vmatpush.msra.mxu0 %v520
  %552 = vmatpush.msra.mxu0 %v519
  %553 = vmatpush.msra.mxu0 %v518
  %554 = vmatpush.msra.mxu0 %v517
  %555 = vmatpush.msra.mxu0 %v516
  %556 = vmatpush.msra.mxu0 %v515
  %557 = vmatpush.msra.mxu0 %v514
  %558 = vmatpush.msra.mxu0 %v513
  %559 = vmatpush.msra.mxu0 %v512
  %560 = vmatmul.f32.gmra.mxu0 %v504
  %v561 = vpop.f32.mrf.mxu0
  %v562 = vadd.f32 0.0, %v561
  %563 = vmatmul.f32.gmra.mxu0 %v505
  %v564 = vpop.f32.mrf.mxu0
  %v565 = vadd.f32 0.0, %v564
  %566 = vdwg.mxu0
  %567 = vmatpush.msra.mxu0 %v543
  %568 = vmatpush.msra.mxu0 %v542
  %569 = vmatpush.msra.mxu0 %v541
  %570 = vmatpush.msra.mxu0 %v540
  %571 = vmatpush.msra.mxu0 %v539
  %572 = vmatpush.msra.mxu0 %v538
  %573 = vmatpush.msra.mxu0 %v537
  %574 = vmatpush.msra.mxu0 %v536
  %575 = vmatpush.msra.mxu0 %v535
  %576 = vmatpush.msra.mxu0 %v534
  %577 = vmatpush.msra.mxu0 %v533
  %578 = vmatpush.msra.mxu0 %v532
  %579 = vmatpush.msra.mxu0 %v531
  %580 = vmatpush.msra.mxu0 %v530
  %581 = vmatpush.msra.mxu0 %v529
  %582 = vmatpush.msra.mxu0 %v528
  %583 = vmatmul.f32.gmra.mxu0 %v510
  %v584 = vpop.f32.mrf.mxu0
  %v585 = vadd.f32 %v562, %v584
  %586 = vmatmul.f32.gmra.mxu0 %v511
  %v587 = vpop.f32.mrf.mxu0
  %v588 = vadd.f32 %v565, %v587
  %589 = vdwg.mxu0
  %vm590 = vcmask 523264
  %591 = vst.msk [vmem:[%s8] sm:$0xff] %vm590, %v585
  %592 = vst.msk [vmem:[%s8 + $0x8] sm:$0xff] %vm590, %v588
  // Predicated region
  $region34: #{at_forward.1} parent=0 // pred_check
    _
  $region35: #{at_forward.1} parent=0 // pred_check_branch
    %594 = sbr.rel (0) target = $region37
  $region36: #{at_forward.1} parent=0 // pred_region
    _
  $region37: #{at_forward.1} parent=0 // pred_fallthru
    _
  // Predicated region
  $region38: #{at_forward.1} parent=0 // pred_check
    _
  $region39: #{at_forward.1} parent=0 // pred_check_branch
    %596 = sbr.rel (0) target = $region41
  $region40: #{at_forward.1} parent=0 // pred_region
    _
  $region41: #{at_forward.1} parent=0 // pred_fallthru
    _

</llo_original>
